<compile_context>
chip_gen: v7x
topology: tpu7x:2x2x1
jax: 0.10.0
libtpu: 0.0.40
codegen_flags: <defaults>
</compile_context>

<pallas_src>
import functools

import jax
import jax.numpy as jnp
from jax.experimental import pallas as pl
from jax.experimental.pallas import tpu as pltpu


def _round_up(x, m):
    return (x + m - 1) // m * m


def _vmem_capacity_bytes():
    """Generation-aware VMEM capacity (128 MiB v5e/v6e, 64 MiB per-core v7x)."""
    try:
        return int(pltpu.get_tpu_info().vmem_capacity_bytes)
    except Exception:
        return 64 * 1024 * 1024          # conservative fallback (v7x-sized)


# --------------------------- resident (small-graph) fast path ---------------------------

def _resident_kernel(adj_ref, e0_ref, out_ref, cur_ref, *, n_layers, inv_scale):
    """Single grid step: whole f32 adjacency + state resident in VMEM.

    adj_ref : (Np, Np) f32   normalized adjacency
    e0_ref  : (Np, Dp) f32   ego embeddings (users ++ items)
    out_ref : (Np, Dp) f32   mean over {E0 .. E_L}
    cur_ref : (Np, Dp) f32   scratch: current-layer embeddings
    """
    cur_ref[...] = e0_ref[...]
    out_ref[...] = e0_ref[...]
    for _ in range(n_layers):            # n_layers is static -> unrolled in-kernel
        cur_ref[...] = jnp.dot(adj_ref[...], cur_ref[...],
                               preferred_element_type=jnp.float32)
        out_ref[...] += cur_ref[...]
    out_ref[...] = out_ref[...] * inv_scale


def _propagate_resident(adj, e0, n_layers, n_pad, dp, vmem_cap):
    n, d = e0.shape
    adj_p = jnp.pad(adj.astype(jnp.float32), ((0, n_pad - n), (0, n_pad - n)))
    e0_p = jnp.pad(e0.astype(jnp.float32), ((0, n_pad - n), (0, dp - d)))

    kernel = functools.partial(_resident_kernel, n_layers=n_layers,
                               inv_scale=1.0 / float(n_layers + 1))
    cost = pl.CostEstimate(
        flops=int(2 * n_layers * n_pad * n_pad * dp),
        transcendentals=0,
        bytes_accessed=int(n_pad * n_pad * 4 + 2 * n_pad * dp * 4))

    out = pl.pallas_call(
        kernel,
        out_shape=jax.ShapeDtypeStruct((n_pad, dp), jnp.float32),
        grid_spec=pltpu.PrefetchScalarGridSpec(
            num_scalar_prefetch=0,
            grid=(1,),
            in_specs=[pl.BlockSpec((n_pad, n_pad), lambda i: (0, 0)),
                      pl.BlockSpec((n_pad, dp), lambda i: (0, 0))],
            out_specs=pl.BlockSpec((n_pad, dp), lambda i: (0, 0)),
            scratch_shapes=[pltpu.VMEM((n_pad, dp), jnp.float32)],
        ),
        compiler_params=pltpu.CompilerParams(
            dimension_semantics=("arbitrary",),
            vmem_limit_bytes=int(0.9 * vmem_cap)),
        cost_estimate=cost,
    )(adj_p, e0_p)
    return out[:n, :d]


# --------------------------- streamed (large-graph) path --------------------------------

def _streamed_kernel(adj_ref, e0_hbm, out_ref, state_ref, acc_ref,
                     *, n_layers, n_pad, tm, tk, inv_scale):
    """One grid step of (layer, row-tile, k-tile): partial (tm,tk)x(tk,Dp) matmul.

    adj_ref   : (tm, tk)      bf16  streamed adjacency tile
    e0_hbm    : (2*Np, Dp)    bf16  HBM: padded ego embeddings (one-shot DMA)
    out_ref   : (Np, Dp)      f32   resident layer-sum accumulator -> layer mean
    state_ref : (2*Np, Dp)    bf16  ping-pong layer state (read l%2, write (l+1)%2)
    acc_ref   : (tm, Dp)      f32   K-partial accumulator for one row tile
    """
    l = pl.program_id(0)           # layer
    i = pl.program_id(1)           # output row tile
    k = pl.program_id(2)           # reduction (column) tile
    ni = pl.num_programs(1)
    nk = pl.num_programs(2)

    row = pl.multiple_of(i * tm, tm)
    col = pl.multiple_of(k * tk, tk)
    read_off = pl.multiple_of((l % 2) * n_pad + col, tk)
    write_off = pl.multiple_of(((l + 1) % 2) * n_pad + row, tm)

    # One-shot init: DMA E0 (HBM, bf16) into the state buffer (slot 0 holds E0,
    # slot 1 arrives zeroed and is fully overwritten during layer 0), and seed
    # the f32 layer-sum accumulator.
    @pl.when((l == 0) & (i == 0) & (k == 0))
    def _():
        pltpu.sync_copy(e0_hbm, state_ref)
        out_ref[...] = state_ref[pl.ds(0, n_pad), :].astype(jnp.float32)

    # Partial matmul on the MXU: bf16 operands, f32 accumulation.
    partial = jnp.dot(adj_ref[...], state_ref[pl.ds(read_off, tk), :],
                      preferred_element_type=jnp.float32)

    @pl.when(k == 0)
    def _():
        acc_ref[...] = partial

    @pl.when(k != 0)
    def _():
        acc_ref[...] += partial

    # End of the K reduction for this row tile: fold into the layer sum and
    # publish this row tile of the new layer into the write slot of the state.
    @pl.when(k == nk - 1)
    def _():
        out_ref[pl.ds(row, tm), :] += acc_ref[...]
        state_ref[pl.ds(write_off, tm), :] = acc_ref[...].astype(jnp.bfloat16)

    # Very last grid step: accumulated sum -> mean over layers.
    # (Must stay after the fold above: add-before-scale ordering.)
    @pl.when((l == n_layers - 1) & (i == ni - 1) & (k == nk - 1))
    def _():
        out_ref[...] = out_ref[...] * inv_scale


def _propagate_streamed(adj, e0, n_layers, dp, vmem_cap):
    n, d = e0.shape
    tile = 512                           # 512-tile: per-step DMA >> grid overhead
    if n <= tile:
        n_pad = _round_up(max(n, 128), 128)
        tm = tk = n_pad                  # single full-extent block per axis
    else:
        n_pad = _round_up(n, tile)
        tm = tk = tile

    # Pad in the narrow dtype (no f32 NxN temporary in HBM). e0 is padded to
    # (2*Np, Dp) so the one-shot DMA fills the whole ping-pong buffer.
    adj_p = jnp.pad(adj.astype(jnp.bfloat16), ((0, n_pad - n), (0, n_pad - n)))
    e0_p = jnp.pad(e0.astype(jnp.bfloat16), ((0, 2 * n_pad - n), (0, dp - d)))

    kernel = functools.partial(_streamed_kernel, n_layers=n_layers, n_pad=n_pad,
                               tm=tm, tk=tk, inv_scale=1.0 / float(n_layers + 1))

    cost = pl.CostEstimate(
        flops=int(2 * n_layers * n_pad * n_pad * dp),
        transcendentals=0,
        bytes_accessed=int(n_layers * n_pad * n_pad * 2     # adjacency stream (bf16)
                           + 2 * n_pad * dp * 2             # e0 (bf16, in HBM)
                           + n_pad * dp * 4))               # output

    out = pl.pallas_call(
        kernel,
        out_shape=jax.ShapeDtypeStruct((n_pad, dp), jnp.float32),
        grid_spec=pltpu.PrefetchScalarGridSpec(
            num_scalar_prefetch=0,
            grid=(n_layers, n_pad // tm, n_pad // tk),
            in_specs=[
                # adjacency: streamed (tm, tk) bf16 tiles
                pl.BlockSpec((tm, tk), lambda l, i, k: (i, k)),
                # ego embeddings: stay in HBM, one-shot DMA inside the kernel
                pl.BlockSpec(memory_space=pl.ANY),
            ],
            # output doubles as the resident f32 layer-sum accumulator
            out_specs=pl.BlockSpec((n_pad, dp), lambda l, i, k: (0, 0)),
            scratch_shapes=[
                pltpu.VMEM((2 * n_pad, dp), jnp.bfloat16),   # ping-pong layer state
                pltpu.VMEM((tm, dp), jnp.float32),           # K-partial accumulator
            ],
        ),
        compiler_params=pltpu.CompilerParams(
            dimension_semantics=("arbitrary", "arbitrary", "arbitrary"),
            vmem_limit_bytes=int(0.9 * vmem_cap)),
        cost_estimate=cost,
    )(adj_p, e0_p)
    return out[:n, :d]


# --------------------------------- public wrappers ---------------------------------------

def lightgcn_propagate(adj, e0, n_layers=3, *, force_streamed=False):
    """Mean over {E0, A E0, ..., A^L E0} with A the (dense) normalized adjacency."""
    assert n_layers >= 1
    n, d = e0.shape
    assert adj.shape == (n, n)

    dp = _round_up(max(d, 128), 128)     # lane-dense embedding dim
    cap = _vmem_capacity_bytes()

    # Resident fast path if the f32 adjacency + state comfortably fit VMEM.
    n_pad_small = _round_up(max(n, 128), 128)
    resident_need = (2 * n_pad_small * n_pad_small * 4       # adjacency (2 buffers)
                     + 8 * n_pad_small * dp * 4)             # e0/out buffers + temps
    if (not force_streamed) and resident_need <= int(0.75 * cap):
        return _propagate_resident(adj, e0, n_layers, n_pad_small, dp, cap)
    return _propagate_streamed(adj, e0, n_layers, dp, cap)


def lightgcn_forward(user_emb, item_emb, norm_adj, users, items, n_layers=3,
                     *, force_streamed=False):
    """Full LightGCNEncoder.forward. Row gathers are plain-JAX glue."""
    user_count = user_emb.shape[0]
    ego = jnp.concatenate([user_emb, item_emb], axis=0)                # (N, D)
    all_emb = lightgcn_propagate(norm_adj, ego, n_layers,
                                 force_streamed=force_streamed)        # (N, D)
    user_all = all_emb[:user_count, :]
    item_all = all_emb[user_count:, :]
    return user_all[users, :], item_all[items, :]


# ----------------------- deterministic parameter / graph setup ---------------------------

def xavier_uniform(key, shape):
    fan_in, fan_out = shape
    bound = (6.0 / (fan_in + fan_out)) ** 0.5
    return jax.random.uniform(key, shape, jnp.float32, -bound, bound)


def build_norm_adj(key, user_count, item_count):
    """Symmetric normalized bipartite adjacency D^{-1/2} A D^{-1/2} (dense)."""
    # TODO(synk): torch.sparse COO storage has no direct Pallas equivalent;
    # the kernel consumes the dense normalized adjacency instead.
    R = (jax.random.uniform(key, (user_count, item_count)) < 0.1).astype(jnp.float32)
    N = user_count + item_count
    A = jnp.zeros((N, N), jnp.float32)
    A = A.at[:user_count, user_count:].set(R)
    A = A.at[user_count:, :user_count].set(R.T)
    deg = jnp.sum(A, axis=1)
    d_inv_sqrt = jnp.where(deg > 0, 1.0 / jnp.sqrt(jnp.maximum(deg, 1e-12)), 0.0)
    return A * d_inv_sqrt[:, None] * d_inv_sqrt[None, :]


def reference_forward(user_emb, item_emb, norm_adj, users, items, n_layers=3):
    ego = jnp.concatenate([user_emb, item_emb], axis=0)
    layers = [ego]
    cur = ego
    for _ in range(n_layers):
        cur = jnp.dot(norm_adj, cur, precision=jax.lax.Precision.HIGHEST)
        layers.append(cur)
    all_emb = jnp.mean(jnp.stack(layers, axis=1), axis=1)
    U = user_emb.shape[0]
    return all_emb[:U][users, :], all_emb[U:][items, :]


def _run_case(key, user_count, item_count, emb_size, n_layers, n_query,
              force_streamed, atol):
    k_u, k_i, k_adj, k_users, k_items = jax.random.split(key, 5)
    user_emb = xavier_uniform(k_u, (user_count, emb_size))
    item_emb = xavier_uniform(k_i, (item_count, emb_size))
    norm_adj = build_norm_adj(k_adj, user_count, item_count)
    users = jax.random.randint(k_users, (n_query,), 0, user_count)
    items = jax.random.randint(k_items, (n_query,), 0, item_count)

    u_out, i_out = lightgcn_forward(user_emb, item_emb, norm_adj, users, items,
                                    n_layers, force_streamed=force_streamed)
    u_out = jax.block_until_ready(u_out)
    i_out = jax.block_until_ready(i_out)

    u_ref, i_ref = reference_forward(user_emb, item_emb, norm_adj, users, items,
                                     n_layers)
    assert u_out.shape == (n_query, emb_size) and i_out.shape == (n_query, emb_size)
    assert jnp.allclose(u_out, u_ref, atol=atol, rtol=atol), \
        float(jnp.max(jnp.abs(u_out - u_ref)))
    assert jnp.allclose(i_out, i_ref, atol=atol, rtol=atol), \
        float(jnp.max(jnp.abs(i_out - i_ref)))


if __name__ == "__main__":
    key = jax.random.PRNGKey(0)
    k1, k2 = jax.random.split(key)

    # 1) Toy graph -> resident f32 fast path (single grid step, tight tolerance).
    _run_case(k1, user_count=48, item_count=80, emb_size=64, n_layers=3,
              n_query=8, force_streamed=False, atol=5e-3)

    # 2) Larger graph forced through the streamed bf16 path (N=720 -> N_pad=1024,
    #    grid (3, 2, 2) of 512x512 adjacency tiles, bf16 ping-pong state).
    _run_case(k2, user_count=300, item_count=420, emb_size=64, n_layers=3,
              n_query=8, force_streamed=True, atol=2e-2)

    print("KERNEL_OK")
</pallas_src>

<mosaic_0001>
module attributes {stable_mosaic.version = 11 : i64} {
  func.func @_resident_kernel(%arg0: i32, %arg1: memref<128x128xf32, #tpu.memory_space<vmem>>, %arg2: memref<128x128xf32, #tpu.memory_space<vmem>>, %arg3: memref<128x128xf32, #tpu.memory_space<vmem>>, %arg4: memref<128x128xf32, #tpu.memory_space<vmem>>) attributes {dimension_semantics = [#tpu.dimension_semantics<arbitrary>], iteration_bounds = array<i64: 1>, scalar_prefetch = 0 : i64, scratch_operands = 1 : i64, tpu.core_type = #tpu.core_type<tc>, window_params = [{pipeline_mode = #tpu.pipeline_mode<synchronous>, transform_indices = @transform_0, window_bounds = array<i64: 128, 128>}, {pipeline_mode = #tpu.pipeline_mode<synchronous>, transform_indices = @transform_1, window_bounds = array<i64: 128, 128>}, {pipeline_mode = #tpu.pipeline_mode<synchronous>, transform_indices = @transform_2, window_bounds = array<i64: 128, 128>}]} {
    %c0 = arith.constant 0 : index
    %c0_0 = arith.constant 0 : index
    %0 = vector.load %arg2[%c0, %c0_0] : memref<128x128xf32, #tpu.memory_space<vmem>>, vector<128x128xf32>
    %c0_1 = arith.constant 0 : index
    %c0_2 = arith.constant 0 : index
    %1 = vector.load %arg4[%c0_1, %c0_2] : memref<128x128xf32, #tpu.memory_space<vmem>>, vector<128x128xf32>
    tpu.vector_store %arg4[%c0_1, %c0_2], %0 {strides = array<i32>} : memref<128x128xf32, #tpu.memory_space<vmem>>, vector<128x128xf32>,
    %c0_3 = arith.constant 0 : index
    %c0_4 = arith.constant 0 : index
    %2 = vector.load %arg2[%c0_3, %c0_4] : memref<128x128xf32, #tpu.memory_space<vmem>>, vector<128x128xf32>
    %c0_5 = arith.constant 0 : index
    %c0_6 = arith.constant 0 : index
    %3 = vector.load %arg3[%c0_5, %c0_6] : memref<128x128xf32, #tpu.memory_space<vmem>>, vector<128x128xf32>
    tpu.vector_store %arg3[%c0_5, %c0_6], %2 {strides = array<i32>} : memref<128x128xf32, #tpu.memory_space<vmem>>, vector<128x128xf32>,
    %c0_7 = arith.constant 0 : index
    %c0_8 = arith.constant 0 : index
    %4 = vector.load %arg1[%c0_7, %c0_8] : memref<128x128xf32, #tpu.memory_space<vmem>>, vector<128x128xf32>
    %c0_9 = arith.constant 0 : index
    %c0_10 = arith.constant 0 : index
    %5 = vector.load %arg4[%c0_9, %c0_10] : memref<128x128xf32, #tpu.memory_space<vmem>>, vector<128x128xf32>
    %cst = arith.constant dense<0.000000e+00> : vector<128x128xf32>
    %6 = tpu.matmul %4, %5, %cst {dimension_numbers = #tpu.dot_dimension_numbers<[1], [0], [0], [1], [0, 0, 1, 1], [], []>} : vector<128x128xf32>, vector<128x128xf32>, vector<128x128xf32> -> vector<128x128xf32>
    %c0_11 = arith.constant 0 : index
    %c0_12 = arith.constant 0 : index
    %7 = vector.load %arg4[%c0_11, %c0_12] : memref<128x128xf32, #tpu.memory_space<vmem>>, vector<128x128xf32>
    tpu.vector_store %arg4[%c0_11, %c0_12], %6 {strides = array<i32>} : memref<128x128xf32, #tpu.memory_space<vmem>>, vector<128x128xf32>,
    %c0_13 = arith.constant 0 : index
    %c0_14 = arith.constant 0 : index
    %8 = vector.load %arg3[%c0_13, %c0_14] : memref<128x128xf32, #tpu.memory_space<vmem>>, vector<128x128xf32>
    %c0_15 = arith.constant 0 : index
    %c0_16 = arith.constant 0 : index
    %9 = vector.load %arg4[%c0_15, %c0_16] : memref<128x128xf32, #tpu.memory_space<vmem>>, vector<128x128xf32>
    %10 = arith.addf %8, %9 : vector<128x128xf32>
    %c0_17 = arith.constant 0 : index
    %c0_18 = arith.constant 0 : index
    %11 = vector.load %arg3[%c0_17, %c0_18] : memref<128x128xf32, #tpu.memory_space<vmem>>, vector<128x128xf32>
    tpu.vector_store %arg3[%c0_17, %c0_18], %10 {strides = array<i32>} : memref<128x128xf32, #tpu.memory_space<vmem>>, vector<128x128xf32>,
    %c0_19 = arith.constant 0 : index
    %c0_20 = arith.constant 0 : index
    %12 = vector.load %arg1[%c0_19, %c0_20] : memref<128x128xf32, #tpu.memory_space<vmem>>, vector<128x128xf32>
    %c0_21 = arith.constant 0 : index
    %c0_22 = arith.constant 0 : index
    %13 = vector.load %arg4[%c0_21, %c0_22] : memref<128x128xf32, #tpu.memory_space<vmem>>, vector<128x128xf32>
    %cst_23 = arith.constant dense<0.000000e+00> : vector<128x128xf32>
    %14 = tpu.matmul %12, %13, %cst_23 {dimension_numbers = #tpu.dot_dimension_numbers<[1], [0], [0], [1], [0, 0, 1, 1], [], []>} : vector<128x128xf32>, vector<128x128xf32>, vector<128x128xf32> -> vector<128x128xf32>
    %c0_24 = arith.constant 0 : index
    %c0_25 = arith.constant 0 : index
    %15 = vector.load %arg4[%c0_24, %c0_25] : memref<128x128xf32, #tpu.memory_space<vmem>>, vector<128x128xf32>
    tpu.vector_store %arg4[%c0_24, %c0_25], %14 {strides = array<i32>} : memref<128x128xf32, #tpu.memory_space<vmem>>, vector<128x128xf32>,
    %c0_26 = arith.constant 0 : index
    %c0_27 = arith.constant 0 : index
    %16 = vector.load %arg3[%c0_26, %c0_27] : memref<128x128xf32, #tpu.memory_space<vmem>>, vector<128x128xf32>
    %c0_28 = arith.constant 0 : index
    %c0_29 = arith.constant 0 : index
    %17 = vector.load %arg4[%c0_28, %c0_29] : memref<128x128xf32, #tpu.memory_space<vmem>>, vector<128x128xf32>
    %18 = arith.addf %16, %17 : vector<128x128xf32>
    %c0_30 = arith.constant 0 : index
    %c0_31 = arith.constant 0 : index
    %19 = vector.load %arg3[%c0_30, %c0_31] : memref<128x128xf32, #tpu.memory_space<vmem>>, vector<128x128xf32>
    tpu.vector_store %arg3[%c0_30, %c0_31], %18 {strides = array<i32>} : memref<128x128xf32, #tpu.memory_space<vmem>>, vector<128x128xf32>,
    %c0_32 = arith.constant 0 : index
    %c0_33 = arith.constant 0 : index
    %20 = vector.load %arg1[%c0_32, %c0_33] : memref<128x128xf32, #tpu.memory_space<vmem>>, vector<128x128xf32>
    %c0_34 = arith.constant 0 : index
    %c0_35 = arith.constant 0 : index
    %21 = vector.load %arg4[%c0_34, %c0_35] : memref<128x128xf32, #tpu.memory_space<vmem>>, vector<128x128xf32>
    %cst_36 = arith.constant dense<0.000000e+00> : vector<128x128xf32>
    %22 = tpu.matmul %20, %21, %cst_36 {dimension_numbers = #tpu.dot_dimension_numbers<[1], [0], [0], [1], [0, 0, 1, 1], [], []>} : vector<128x128xf32>, vector<128x128xf32>, vector<128x128xf32> -> vector<128x128xf32>
    %c0_37 = arith.constant 0 : index
    %c0_38 = arith.constant 0 : index
    %23 = vector.load %arg4[%c0_37, %c0_38] : memref<128x128xf32, #tpu.memory_space<vmem>>, vector<128x128xf32>
    tpu.vector_store %arg4[%c0_37, %c0_38], %22 {strides = array<i32>} : memref<128x128xf32, #tpu.memory_space<vmem>>, vector<128x128xf32>,
    %c0_39 = arith.constant 0 : index
    %c0_40 = arith.constant 0 : index
    %24 = vector.load %arg3[%c0_39, %c0_40] : memref<128x128xf32, #tpu.memory_space<vmem>>, vector<128x128xf32>
    %c0_41 = arith.constant 0 : index
    %c0_42 = arith.constant 0 : index
    %25 = vector.load %arg4[%c0_41, %c0_42] : memref<128x128xf32, #tpu.memory_space<vmem>>, vector<128x128xf32>
    %26 = arith.addf %24, %25 : vector<128x128xf32>
    %c0_43 = arith.constant 0 : index
    %c0_44 = arith.constant 0 : index
    %27 = vector.load %arg3[%c0_43, %c0_44] : memref<128x128xf32, #tpu.memory_space<vmem>>, vector<128x128xf32>
    tpu.vector_store %arg3[%c0_43, %c0_44], %26 {strides = array<i32>} : memref<128x128xf32, #tpu.memory_space<vmem>>, vector<128x128xf32>,
    %c0_45 = arith.constant 0 : index
    %c0_46 = arith.constant 0 : index
    %28 = vector.load %arg3[%c0_45, %c0_46] : memref<128x128xf32, #tpu.memory_space<vmem>>, vector<128x128xf32>
    %cst_47 = arith.constant 2.500000e-01 : f32
    %29 = vector.broadcast %cst_47 : f32 to vector<128x128xf32>
    %30 = arith.mulf %28, %29 : vector<128x128xf32>
    %c0_48 = arith.constant 0 : index
    %c0_49 = arith.constant 0 : index
    %31 = vector.load %arg3[%c0_48, %c0_49] : memref<128x128xf32, #tpu.memory_space<vmem>>, vector<128x128xf32>
    tpu.vector_store %arg3[%c0_48, %c0_49], %30 {strides = array<i32>} : memref<128x128xf32, #tpu.memory_space<vmem>>, vector<128x128xf32>,
    return
  }
  func.func @transform_0(%arg0: i32) -> (i32, i32) {
    %c0_i32 = arith.constant 0 : i32
    %c0_i32_0 = arith.constant 0 : i32
    %c0_i32_1 = arith.constant 0 : i32
    return %c0_i32, %c0_i32_0 : i32, i32
  }
  func.func @transform_1(%arg0: i32) -> (i32, i32) {
    %c0_i32 = arith.constant 0 : i32
    %c0_i32_0 = arith.constant 0 : i32
    %c0_i32_1 = arith.constant 0 : i32
    return %c0_i32, %c0_i32_0 : i32, i32
  }
  func.func @transform_2(%arg0: i32) -> (i32, i32) {
    %c0_i32 = arith.constant 0 : i32
    %c0_i32_0 = arith.constant 0 : i32
    %c0_i32_1 = arith.constant 0 : i32
    return %c0_i32, %c0_i32_0 : i32, i32
  }
}

</mosaic_0001>

<llo_original>
// kernel: tpu_custom_call.1
$region0: #{tpu_custom_call.1}
  #allocation0 [shape = 'u32[]', space=smem, size = 0x4, offset = 0x4, fixed_abs, tag = 'smem constant byte address 0x4 - core index']
  #allocation1 [shape = 'u32[144,128]{1,0:T(1,128)}', space=vmem, size = 0x12000, scoped, tag = 'internal scratch']
  #allocation2 [shape = 'f32[128,128]{1,0:T(8,128)}', space=vmem, size = 0x10000, scoped, tag = 'scratch operand']
  %s0 = inlined_call_operand.hbm [shape: f32[128,128], index: 0, kind: input, shape index: {}]
  %s1 = inlined_call_operand.hbm [shape: f32[128,128], index: 1, kind: input, shape index: {}]
  %s2 = inlined_call_operand.hbm [shape: f32[128,128], index: 2, kind: output, shape index: {}]
  %s3 = sld [smem:[#allocation0]]
  $region26: #{tpu_custom_call.1} parent=0
    _
  %s5 = ssub.s32 1, %s3
  %s6 = scalar_select 0, %s5, %s3
  $region1: #{tpu_custom_call.1} parent=0
    #allocation3 [shape = 'u8[65536]{0}', space=vmem, size = 0x10000, scoped, tag = 'input window, operand 0, single buffered']
    #allocation4 [shape = 's32[1]{0}', space=sflag, size = 0x4, scoped, tag = 'scoped memory for tpu_custom_call.1']
    #allocation5 [shape = 's32[1]{0}', space=sflag, size = 0x4, scoped, tag = 'scoped memory for tpu_custom_call.1']
    #allocation6 [shape = 'u8[65536]{0}', space=vmem, size = 0x10000, scoped, tag = 'input window, operand 1, single buffered']
    #allocation7 [shape = 's32[1]{0}', space=sflag, size = 0x4, scoped, tag = 'scoped memory for tpu_custom_call.1']
    #allocation8 [shape = 'u8[65536]{0}', space=vmem, size = 0x10000, scoped, tag = 'output window, operand 0, single buffered']
    %7 = vsyncpa [#allocation4], 0
    %8 = vsyncpa [#allocation7], 0
    %9 = vsyncpa [#allocation5], 0
    // Predicated region
    $region2: #{tpu_custom_call.1} parent=1 // pred_check
      _
    $region3: #{tpu_custom_call.1} parent=1 // pred_check_branch
      %11 = sbr.rel (0) target = $region5
    $region4: #{tpu_custom_call.1} parent=1 // pred_region
      %s13 = ssub.s32 2048, 2048
      %14 = vsyncadd [#allocation4], %s13
      %s15 = sshll.u32 [#allocation3], 4
      %s16 = int_to_ptr.vmem [resolvable:$true] %s15
      %21 = dma.hbm_to_vmem [thread:$0]  %s0, 2048, %s16, [#allocation4], 128, 128, 8
    $region5: #{tpu_custom_call.1} parent=1 // pred_fallthru
      _
    // Predicated region
    $region6: #{tpu_custom_call.1} parent=1 // pred_check
      _
    $region7: #{tpu_custom_call.1} parent=1 // pred_check_branch
      %23 = sbr.rel (0) target = $region9
    $region8: #{tpu_custom_call.1} parent=1 // pred_region
      %s25 = ssub.s32 2048, 2048
      %26 = vsyncadd [#allocation7], %s25
      %s27 = sshll.u32 [#allocation6], 4
      %s28 = int_to_ptr.vmem [resolvable:$true] %s27
      %33 = dma.hbm_to_vmem [thread:$0]  %s1, 2048, %s28, [#allocation7], 128, 128, 8
    $region9: #{tpu_custom_call.1} parent=1 // pred_fallthru
      _
    // Predicated region
    $region10: #{tpu_custom_call.1} parent=1 // pred_check
      _
    $region11: #{tpu_custom_call.1} parent=1 // pred_check_branch
      %35 = sbr.rel (0) target = $region13
    $region12: #{tpu_custom_call.1} parent=1 // pred_region
      %36 = dma.done [#allocation4], 2048
    $region13: #{tpu_custom_call.1} parent=1 // pred_fallthru
      _
    // Predicated region
    $region14: #{tpu_custom_call.1} parent=1 // pred_check
      _
    $region15: #{tpu_custom_call.1} parent=1 // pred_check_branch
      %38 = sbr.rel (0) target = $region17
    $region16: #{tpu_custom_call.1} parent=1 // pred_region
      %39 = dma.done [#allocation7], 2048
    $region17: #{tpu_custom_call.1} parent=1 // pred_fallthru
      _
    %v40 = vld [vmem:[#allocation6] sm:$0xff]
    %v41 = vld [vmem:[#allocation6 + $0x8] sm:$0xff]
    %v42 = vld [vmem:[#allocation6 + $0x10] sm:$0xff]
    %v43 = vld [vmem:[#allocation6 + $0x18] sm:$0xff]
    %v44 = vld [vmem:[#allocation6 + $0x20] sm:$0xff]
    %v45 = vld [vmem:[#allocation6 + $0x28] sm:$0xff]
    %v46 = vld [vmem:[#allocation6 + $0x30] sm:$0xff]
    %v47 = vld [vmem:[#allocation6 + $0x38] sm:$0xff]
    %v48 = vld [vmem:[#allocation6 + $0x40] sm:$0xff]
    %v49 = vld [vmem:[#allocation6 + $0x48] sm:$0xff]
    %v50 = vld [vmem:[#allocation6 + $0x50] sm:$0xff]
    %v51 = vld [vmem:[#allocation6 + $0x58] sm:$0xff]
    %v52 = vld [vmem:[#allocation6 + $0x60] sm:$0xff]
    %v53 = vld [vmem:[#allocation6 + $0x68] sm:$0xff]
    %v54 = vld [vmem:[#allocation6 + $0x70] sm:$0xff]
    %v55 = vld [vmem:[#allocation6 + $0x78] sm:$0xff]
    %56 = vst [vmem:[#allocation2] sm:$0xff] %v40
    %57 = vst [vmem:[#allocation2 + $0x8] sm:$0xff] %v41
    %58 = vst [vmem:[#allocation2 + $0x10] sm:$0xff] %v42
    %59 = vst [vmem:[#allocation2 + $0x18] sm:$0xff] %v43
    %60 = vst [vmem:[#allocation2 + $0x20] sm:$0xff] %v44
    %61 = vst [vmem:[#allocation2 + $0x28] sm:$0xff] %v45
    %62 = vst [vmem:[#allocation2 + $0x30] sm:$0xff] %v46
    %63 = vst [vmem:[#allocation2 + $0x38] sm:$0xff] %v47
    %64 = vst [vmem:[#allocation2 + $0x40] sm:$0xff] %v48
    %65 = vst [vmem:[#allocation2 + $0x48] sm:$0xff] %v49
    %66 = vst [vmem:[#allocation2 + $0x50] sm:$0xff] %v50
    %67 = vst [vmem:[#allocation2 + $0x58] sm:$0xff] %v51
    %68 = vst [vmem:[#allocation2 + $0x60] sm:$0xff] %v52
    %69 = vst [vmem:[#allocation2 + $0x68] sm:$0xff] %v53
    %70 = vst [vmem:[#allocation2 + $0x70] sm:$0xff] %v54
    %71 = vst [vmem:[#allocation2 + $0x78] sm:$0xff] %v55
    %v72 = vld [vmem:[#allocation6] sm:$0xff]
    %v73 = vld [vmem:[#allocation6 + $0x8] sm:$0xff]
    %v74 = vld [vmem:[#allocation6 + $0x10] sm:$0xff]
    %v75 = vld [vmem:[#allocation6 + $0x18] sm:$0xff]
    %v76 = vld [vmem:[#allocation6 + $0x20] sm:$0xff]
    %v77 = vld [vmem:[#allocation6 + $0x28] sm:$0xff]
    %v78 = vld [vmem:[#allocation6 + $0x30] sm:$0xff]
    %v79 = vld [vmem:[#allocation6 + $0x38] sm:$0xff]
    %v80 = vld [vmem:[#allocation6 + $0x40] sm:$0xff]
    %v81 = vld [vmem:[#allocation6 + $0x48] sm:$0xff]
    %v82 = vld [vmem:[#allocation6 + $0x50] sm:$0xff]
    %v83 = vld [vmem:[#allocation6 + $0x58] sm:$0xff]
    %v84 = vld [vmem:[#allocation6 + $0x60] sm:$0xff]
    %v85 = vld [vmem:[#allocation6 + $0x68] sm:$0xff]
    %v86 = vld [vmem:[#allocation6 + $0x70] sm:$0xff]
    %v87 = vld [vmem:[#allocation6 + $0x78] sm:$0xff]
    %88 = vst [vmem:[#allocation8] sm:$0xff] %v72
    %89 = vst [vmem:[#allocation8 + $0x8] sm:$0xff] %v73
    %90 = vst [vmem:[#allocation8 + $0x10] sm:$0xff] %v74
    %91 = vst [vmem:[#allocation8 + $0x18] sm:$0xff] %v75
    %92 = vst [vmem:[#allocation8 + $0x20] sm:$0xff] %v76
    %93 = vst [vmem:[#allocation8 + $0x28] sm:$0xff] %v77
    %94 = vst [vmem:[#allocation8 + $0x30] sm:$0xff] %v78
    %95 = vst [vmem:[#allocation8 + $0x38] sm:$0xff] %v79
    %96 = vst [vmem:[#allocation8 + $0x40] sm:$0xff] %v80
    %97 = vst [vmem:[#allocation8 + $0x48] sm:$0xff] %v81
    %98 = vst [vmem:[#allocation8 + $0x50] sm:$0xff] %v82
    %99 = vst [vmem:[#allocation8 + $0x58] sm:$0xff] %v83
    %100 = vst [vmem:[#allocation8 + $0x60] sm:$0xff] %v84
    %101 = vst [vmem:[#allocation8 + $0x68] sm:$0xff] %v85
    %102 = vst [vmem:[#allocation8 + $0x70] sm:$0xff] %v86
    %103 = vst [vmem:[#allocation8 + $0x78] sm:$0xff] %v87
    %v104 = vld [vmem:[#allocation3] sm:$0xff]
    %v105 = vld [vmem:[#allocation3 + $0x8] sm:$0xff]
    %v106 = vld [vmem:[#allocation3 + $0x10] sm:$0xff]
    %v107 = vld [vmem:[#allocation3 + $0x18] sm:$0xff]
    %v108 = vld [vmem:[#allocation3 + $0x20] sm:$0xff]
    %v109 = vld [vmem:[#allocation3 + $0x28] sm:$0xff]
    %v110 = vld [vmem:[#allocation3 + $0x30] sm:$0xff]
    %v111 = vld [vmem:[#allocation3 + $0x38] sm:$0xff]
    %v112 = vld [vmem:[#allocation3 + $0x40] sm:$0xff]
    %v113 = vld [vmem:[#allocation3 + $0x48] sm:$0xff]
    %v114 = vld [vmem:[#allocation3 + $0x50] sm:$0xff]
    %v115 = vld [vmem:[#allocation3 + $0x58] sm:$0xff]
    %v116 = vld [vmem:[#allocation3 + $0x60] sm:$0xff]
    %v117 = vld [vmem:[#allocation3 + $0x68] sm:$0xff]
    %v118 = vld [vmem:[#allocation3 + $0x70] sm:$0xff]
    %v119 = vld [vmem:[#allocation3 + $0x78] sm:$0xff]
    %v120 = vld [vmem:[#allocation2] sm:$0xff]
    %v121 = vld [vmem:[#allocation2 + $0x8] sm:$0xff]
    %v122 = vld [vmem:[#allocation2 + $0x10] sm:$0xff]
    %v123 = vld [vmem:[#allocation2 + $0x18] sm:$0xff]
    %v124 = vld [vmem:[#allocation2 + $0x20] sm:$0xff]
    %v125 = vld [vmem:[#allocation2 + $0x28] sm:$0xff]
    %v126 = vld [vmem:[#allocation2 + $0x30] sm:$0xff]
    %v127 = vld [vmem:[#allocation2 + $0x38] sm:$0xff]
    %v128 = vld [vmem:[#allocation2 + $0x40] sm:$0xff]
    %v129 = vld [vmem:[#allocation2 + $0x48] sm:$0xff]
    %v130 = vld [vmem:[#allocation2 + $0x50] sm:$0xff]
    %v131 = vld [vmem:[#allocation2 + $0x58] sm:$0xff]
    %v132 = vld [vmem:[#allocation2 + $0x60] sm:$0xff]
    %v133 = vld [vmem:[#allocation2 + $0x68] sm:$0xff]
    %v134 = vld [vmem:[#allocation2 + $0x70] sm:$0xff]
    %v135 = vld [vmem:[#allocation2 + $0x78] sm:$0xff]
    %136 = vmatprep.subr.mxu0 0.0
    %137 = vmatpush1.msra.mxu0 %v120
    %138 = vmatprep.subr.mxu0 0.0
    %139 = vmatpush1.msra.mxu0 %v121
    %140 = vmatprep.subr.mxu0 0.0
    %141 = vmatpush1.msra.mxu0 %v122
    %142 = vmatprep.subr.mxu0 0.0
    %143 = vmatpush1.msra.mxu0 %v123
    %144 = vmatprep.subr.mxu0 0.0
    %145 = vmatpush1.msra.mxu0 %v124
    %146 = vmatprep.subr.mxu0 0.0
    %147 = vmatpush1.msra.mxu0 %v125
    %148 = vmatprep.subr.mxu0 0.0
    %149 = vmatpush1.msra.mxu0 %v126
    %150 = vmatprep.subr.mxu0 0.0
    %151 = vmatpush1.msra.mxu0 %v127
    %152 = vmatprep.subr.mxu0 0.0
    %153 = vmatpush1.msra.mxu0 %v128
    %154 = vmatprep.subr.mxu0 0.0
    %155 = vmatpush1.msra.mxu0 %v129
    %156 = vmatprep.subr.mxu0 0.0
    %157 = vmatpush1.msra.mxu0 %v130
    %158 = vmatprep.subr.mxu0 0.0
    %159 = vmatpush1.msra.mxu0 %v131
    %160 = vmatprep.subr.mxu0 0.0
    %161 = vmatpush1.msra.mxu0 %v132
    %162 = vmatprep.subr.mxu0 0.0
    %163 = vmatpush1.msra.mxu0 %v133
    %164 = vmatprep.subr.mxu0 0.0
    %165 = vmatpush1.msra.mxu0 %v134
    %166 = vmatprep.subr.mxu0 0.0
    %167 = vmatpush1.msra.mxu0 %v135
    %168 = vmatprep.subr.mxu0 0.0
    %169 = vmatpush1.msra.mxu0 0.0
    %170 = vmatprep.subr.mxu0 0.0
    %171 = vmatpush1.msra.mxu0 0.0
    %172 = vmatprep.subr.mxu0 0.0
    %173 = vmatpush1.msra.mxu0 0.0
    %174 = vmatprep.subr.mxu0 0.0
    %175 = vmatpush1.msra.mxu0 0.0
    %176 = vmatprep.subr.mxu0 0.0
    %177 = vmatpush1.msra.mxu0 0.0
    %178 = vmatprep.subr.mxu0 0.0
    %179 = vmatpush1.msra.mxu0 0.0
    %180 = vmatprep.subr.mxu0 0.0
    %181 = vmatpush1.msra.mxu0 0.0
    %182 = vmatprep.subr.mxu0 0.0
    %183 = vmatpush1.msra.mxu0 0.0
    %184 = vmatprep.subr.mxu0 0.0
    %185 = vmatpush1.msra.mxu0 0.0
    %186 = vmatprep.subr.mxu0 0.0
    %187 = vmatpush1.msra.mxu0 0.0
    %188 = vmatprep.subr.mxu0 0.0
    %189 = vmatpush1.msra.mxu0 0.0
    %190 = vmatprep.subr.mxu0 0.0
    %191 = vmatpush1.msra.mxu0 0.0
    %192 = vmatprep.subr.mxu0 0.0
    %193 = vmatpush1.msra.mxu0 0.0
    %194 = vmatprep.subr.mxu0 0.0
    %195 = vmatpush1.msra.mxu0 0.0
    %196 = vmatprep.subr.mxu0 0.0
    %197 = vmatpush1.msra.mxu0 0.0
    %198 = vmatprep.subr.mxu0 0.0
    %199 = vmatpush1.msra.mxu0 0.0
    %200 = vmatprep.mubr.f32.mxu0 0.0
    %201 = vmatmul.mubr.f32.gmra.mrb[0].mxu0 %v104
    %v202 = vpop.f32.mrb[0].mxu0
    %v203 = vadd.f32 0.0, %v202
    %v204 = vpop.f32.mrb[0].mxu0
    %205 = vmatprep.mubr.f32.mxu0 0.0
    %206 = vmatmul.mubr.f32.gmra.mrb[0].mxu0 %v105
    %v207 = vpop.f32.mrb[0].mxu0
    %v208 = vadd.f32 0.0, %v207
    %v209 = vpop.f32.mrb[0].mxu0
    %210 = vmatprep.mubr.f32.mxu0 0.0
    %211 = vmatmul.mubr.f32.gmra.mrb[0].mxu0 %v106
    %v212 = vpop.f32.mrb[0].mxu0
    %v213 = vadd.f32 0.0, %v212
    %v214 = vpop.f32.mrb[0].mxu0
    %215 = vmatprep.mubr.f32.mxu0 0.0
    %216 = vmatmul.mubr.f32.gmra.mrb[0].mxu0 %v107
    %v217 = vpop.f32.mrb[0].mxu0
    %v218 = vadd.f32 0.0, %v217
    %v219 = vpop.f32.mrb[0].mxu0
    %220 = vmatprep.mubr.f32.mxu0 0.0
    %221 = vmatmul.mubr.f32.gmra.mrb[0].mxu0 %v108
    %v222 = vpop.f32.mrb[0].mxu0
    %v223 = vadd.f32 0.0, %v222
    %v224 = vpop.f32.mrb[0].mxu0
    %225 = vmatprep.mubr.f32.mxu0 0.0
    %226 = vmatmul.mubr.f32.gmra.mrb[0].mxu0 %v109
    %v227 = vpop.f32.mrb[0].mxu0
    %v228 = vadd.f32 0.0, %v227
    %v229 = vpop.f32.mrb[0].mxu0
    %230 = vmatprep.mubr.f32.mxu0 0.0
    %231 = vmatmul.mubr.f32.gmra.mrb[0].mxu0 %v110
    %v232 = vpop.f32.mrb[0].mxu0
    %v233 = vadd.f32 0.0, %v232
    %v234 = vpop.f32.mrb[0].mxu0
    %235 = vmatprep.mubr.f32.mxu0 0.0
    %236 = vmatmul.mubr.f32.gmra.mrb[0].mxu0 %v111
    %v237 = vpop.f32.mrb[0].mxu0
    %v238 = vadd.f32 0.0, %v237
    %v239 = vpop.f32.mrb[0].mxu0
    %240 = vmatprep.mubr.f32.mxu0 0.0
    %241 = vmatmul.mubr.f32.gmra.mrb[0].mxu0 %v112
    %v242 = vpop.f32.mrb[0].mxu0
    %v243 = vadd.f32 0.0, %v242
    %v244 = vpop.f32.mrb[0].mxu0
    %245 = vmatprep.mubr.f32.mxu0 0.0
    %246 = vmatmul.mubr.f32.gmra.mrb[0].mxu0 %v113
    %v247 = vpop.f32.mrb[0].mxu0
    %v248 = vadd.f32 0.0, %v247
    %v249 = vpop.f32.mrb[0].mxu0
    %250 = vmatprep.mubr.f32.mxu0 0.0
    %251 = vmatmul.mubr.f32.gmra.mrb[0].mxu0 %v114
    %v252 = vpop.f32.mrb[0].mxu0
    %v253 = vadd.f32 0.0, %v252
    %v254 = vpop.f32.mrb[0].mxu0
    %255 = vmatprep.mubr.f32.mxu0 0.0
    %256 = vmatmul.mubr.f32.gmra.mrb[0].mxu0 %v115
    %v257 = vpop.f32.mrb[0].mxu0
    %v258 = vadd.f32 0.0, %v257
    %v259 = vpop.f32.mrb[0].mxu0
    %260 = vmatprep.mubr.f32.mxu0 0.0
    %261 = vmatmul.mubr.f32.gmra.mrb[0].mxu0 %v116
    %v262 = vpop.f32.mrb[0].mxu0
    %v263 = vadd.f32 0.0, %v262
    %v264 = vpop.f32.mrb[0].mxu0
    %265 = vmatprep.mubr.f32.mxu0 0.0
    %266 = vmatmul.mubr.f32.gmra.mrb[0].mxu0 %v117
    %v267 = vpop.f32.mrb[0].mxu0
    %v268 = vadd.f32 0.0, %v267
    %v269 = vpop.f32.mrb[0].mxu0
    %270 = vmatprep.mubr.f32.mxu0 0.0
    %271 = vmatmul.mubr.f32.gmra.mrb[0].mxu0 %v118
    %v272 = vpop.f32.mrb[0].mxu0
    %v273 = vadd.f32 0.0, %v272
    %v274 = vpop.f32.mrb[0].mxu0
    %275 = vmatprep.mubr.f32.mxu0 0.0
    %276 = vmatmul.mubr.f32.gmra.mrb[0].mxu0 %v119
    %v277 = vpop.f32.mrb[0].mxu0
    %v278 = vadd.f32 0.0, %v277
    %v279 = vpop.f32.mrb[0].mxu0
    %280 = vdwg.mxu0
    %281 = vst [vmem:[#allocation2] sm:$0xff] %v203
    %282 = vst [vmem:[#allocation2 + $0x8] sm:$0xff] %v208
    %283 = vst [vmem:[#allocation2 + $0x10] sm:$0xff] %v213
    %284 = vst [vmem:[#allocation2 + $0x18] sm:$0xff] %v218
    %285 = vst [vmem:[#allocation2 + $0x20] sm:$0xff] %v223
    %286 = vst [vmem:[#allocation2 + $0x28] sm:$0xff] %v228
    %287 = vst [vmem:[#allocation2 + $0x30] sm:$0xff] %v233
    %288 = vst [vmem:[#allocation2 + $0x38] sm:$0xff] %v238
    %289 = vst [vmem:[#allocation2 + $0x40] sm:$0xff] %v243
    %290 = vst [vmem:[#allocation2 + $0x48] sm:$0xff] %v248
    %291 = vst [vmem:[#allocation2 + $0x50] sm:$0xff] %v253
    %292 = vst [vmem:[#allocation2 + $0x58] sm:$0xff] %v258
    %293 = vst [vmem:[#allocation2 + $0x60] sm:$0xff] %v263
    %294 = vst [vmem:[#allocation2 + $0x68] sm:$0xff] %v268
    %295 = vst [vmem:[#allocation2 + $0x70] sm:$0xff] %v273
    %296 = vst [vmem:[#allocation2 + $0x78] sm:$0xff] %v278
    %v297 = vld [vmem:[#allocation8] sm:$0xff]
    %v298 = vld [vmem:[#allocation8 + $0x8] sm:$0xff]
    %v299 = vld [vmem:[#allocation8 + $0x10] sm:$0xff]
    %v300 = vld [vmem:[#allocation8 + $0x18] sm:$0xff]
    %v301 = vld [vmem:[#allocation8 + $0x20] sm:$0xff]
    %v302 = vld [vmem:[#allocation8 + $0x28] sm:$0xff]
    %v303 = vld [vmem:[#allocation8 + $0x30] sm:$0xff]
    %v304 = vld [vmem:[#allocation8 + $0x38] sm:$0xff]
    %v305 = vld [vmem:[#allocation8 + $0x40] sm:$0xff]
    %v306 = vld [vmem:[#allocation8 + $0x48] sm:$0xff]
    %v307 = vld [vmem:[#allocation8 + $0x50] sm:$0xff]
    %v308 = vld [vmem:[#allocation8 + $0x58] sm:$0xff]
    %v309 = vld [vmem:[#allocation8 + $0x60] sm:$0xff]
    %v310 = vld [vmem:[#allocation8 + $0x68] sm:$0xff]
    %v311 = vld [vmem:[#allocation8 + $0x70] sm:$0xff]
    %v312 = vld [vmem:[#allocation8 + $0x78] sm:$0xff]
    %v313 = vld [vmem:[#allocation2] sm:$0xff]
    %v314 = vld [vmem:[#allocation2 + $0x8] sm:$0xff]
    %v315 = vld [vmem:[#allocation2 + $0x10] sm:$0xff]
    %v316 = vld [vmem:[#allocation2 + $0x18] sm:$0xff]
    %v317 = vld [vmem:[#allocation2 + $0x20] sm:$0xff]
    %v318 = vld [vmem:[#allocation2 + $0x28] sm:$0xff]
    %v319 = vld [vmem:[#allocation2 + $0x30] sm:$0xff]
    %v320 = vld [vmem:[#allocation2 + $0x38] sm:$0xff]
    %v321 = vld [vmem:[#allocation2 + $0x40] sm:$0xff]
    %v322 = vld [vmem:[#allocation2 + $0x48] sm:$0xff]
    %v323 = vld [vmem:[#allocation2 + $0x50] sm:$0xff]
    %v324 = vld [vmem:[#allocation2 + $0x58] sm:$0xff]
    %v325 = vld [vmem:[#allocation2 + $0x60] sm:$0xff]
    %v326 = vld [vmem:[#allocation2 + $0x68] sm:$0xff]
    %v327 = vld [vmem:[#allocation2 + $0x70] sm:$0xff]
    %v328 = vld [vmem:[#allocation2 + $0x78] sm:$0xff]
    %v329 = vadd.f32 %v297, %v313
    %v330 = vadd.f32 %v298, %v314
    %v331 = vadd.f32 %v299, %v315
    %v332 = vadd.f32 %v300, %v316
    %v333 = vadd.f32 %v301, %v317
    %v334 = vadd.f32 %v302, %v318
    %v335 = vadd.f32 %v303, %v319
    %v336 = vadd.f32 %v304, %v320
    %v337 = vadd.f32 %v305, %v321
    %v338 = vadd.f32 %v306, %v322
    %v339 = vadd.f32 %v307, %v323
    %v340 = vadd.f32 %v308, %v324
    %v341 = vadd.f32 %v309, %v325
    %v342 = vadd.f32 %v310, %v326
    %v343 = vadd.f32 %v311, %v327
    %v344 = vadd.f32 %v312, %v328
    %345 = vst [vmem:[#allocation8] sm:$0xff] %v329
    %346 = vst [vmem:[#allocation8 + $0x8] sm:$0xff] %v330
    %347 = vst [vmem:[#allocation8 + $0x10] sm:$0xff] %v331
    %348 = vst [vmem:[#allocation8 + $0x18] sm:$0xff] %v332
    %349 = vst [vmem:[#allocation8 + $0x20] sm:$0xff] %v333
    %350 = vst [vmem:[#allocation8 + $0x28] sm:$0xff] %v334
    %351 = vst [vmem:[#allocation8 + $0x30] sm:$0xff] %v335
    %352 = vst [vmem:[#allocation8 + $0x38] sm:$0xff] %v336
    %353 = vst [vmem:[#allocation8 + $0x40] sm:$0xff] %v337
    %354 = vst [vmem:[#allocation8 + $0x48] sm:$0xff] %v338
    %355 = vst [vmem:[#allocation8 + $0x50] sm:$0xff] %v339
    %356 = vst [vmem:[#allocation8 + $0x58] sm:$0xff] %v340
    %357 = vst [vmem:[#allocation8 + $0x60] sm:$0xff] %v341
    %358 = vst [vmem:[#allocation8 + $0x68] sm:$0xff] %v342
    %359 = vst [vmem:[#allocation8 + $0x70] sm:$0xff] %v343
    %360 = vst [vmem:[#allocation8 + $0x78] sm:$0xff] %v344
    %v361 = vld [vmem:[#allocation3] sm:$0xff]
    %v362 = vld [vmem:[#allocation3 + $0x8] sm:$0xff]
    %v363 = vld [vmem:[#allocation3 + $0x10] sm:$0xff]
    %v364 = vld [vmem:[#allocation3 + $0x18] sm:$0xff]
    %v365 = vld [vmem:[#allocation3 + $0x20] sm:$0xff]
    %v366 = vld [vmem:[#allocation3 + $0x28] sm:$0xff]
    %v367 = vld [vmem:[#allocation3 + $0x30] sm:$0xff]
    %v368 = vld [vmem:[#allocation3 + $0x38] sm:$0xff]
    %v369 = vld [vmem:[#allocation3 + $0x40] sm:$0xff]
    %v370 = vld [vmem:[#allocation3 + $0x48] sm:$0xff]
    %v371 = vld [vmem:[#allocation3 + $0x50] sm:$0xff]
    %v372 = vld [vmem:[#allocation3 + $0x58] sm:$0xff]
    %v373 = vld [vmem:[#allocation3 + $0x60] sm:$0xff]
    %v374 = vld [vmem:[#allocation3 + $0x68] sm:$0xff]
    %v375 = vld [vmem:[#allocation3 + $0x70] sm:$0xff]
    %v376 = vld [vmem:[#allocation3 + $0x78] sm:$0xff]
    %v377 = vld [vmem:[#allocation2] sm:$0xff]
    %v378 = vld [vmem:[#allocation2 + $0x8] sm:$0xff]
    %v379 = vld [vmem:[#allocation2 + $0x10] sm:$0xff]
    %v380 = vld [vmem:[#allocation2 + $0x18] sm:$0xff]
    %v381 = vld [vmem:[#allocation2 + $0x20] sm:$0xff]
    %v382 = vld [vmem:[#allocation2 + $0x28] sm:$0xff]
    %v383 = vld [vmem:[#allocation2 + $0x30] sm:$0xff]
    %v384 = vld [vmem:[#allocation2 + $0x38] sm:$0xff]
    %v385 = vld [vmem:[#allocation2 + $0x40] sm:$0xff]
    %v386 = vld [vmem:[#allocation2 + $0x48] sm:$0xff]
    %v387 = vld [vmem:[#allocation2 + $0x50] sm:$0xff]
    %v388 = vld [vmem:[#allocation2 + $0x58] sm:$0xff]
    %v389 = vld [vmem:[#allocation2 + $0x60] sm:$0xff]
    %v390 = vld [vmem:[#allocation2 + $0x68] sm:$0xff]
    %v391 = vld [vmem:[#allocation2 + $0x70] sm:$0xff]
    %v392 = vld [vmem:[#allocation2 + $0x78] sm:$0xff]
    %393 = vmatprep.subr.mxu0 0.0
    %394 = vmatpush1.msra.mxu0 %v377
    %395 = vmatprep.subr.mxu0 0.0
    %396 = vmatpush1.msra.mxu0 %v378
    %397 = vmatprep.subr.mxu0 0.0
    %398 = vmatpush1.msra.mxu0 %v379
    %399 = vmatprep.subr.mxu0 0.0
    %400 = vmatpush1.msra.mxu0 %v380
    %401 = vmatprep.subr.mxu0 0.0
    %402 = vmatpush1.msra.mxu0 %v381
    %403 = vmatprep.subr.mxu0 0.0
    %404 = vmatpush1.msra.mxu0 %v382
    %405 = vmatprep.subr.mxu0 0.0
    %406 = vmatpush1.msra.mxu0 %v383
    %407 = vmatprep.subr.mxu0 0.0
    %408 = vmatpush1.msra.mxu0 %v384
    %409 = vmatprep.subr.mxu0 0.0
    %410 = vmatpush1.msra.mxu0 %v385
    %411 = vmatprep.subr.mxu0 0.0
    %412 = vmatpush1.msra.mxu0 %v386
    %413 = vmatprep.subr.mxu0 0.0
    %414 = vmatpush1.msra.mxu0 %v387
    %415 = vmatprep.subr.mxu0 0.0
    %416 = vmatpush1.msra.mxu0 %v388
    %417 = vmatprep.subr.mxu0 0.0
    %418 = vmatpush1.msra.mxu0 %v389
    %419 = vmatprep.subr.mxu0 0.0
    %420 = vmatpush1.msra.mxu0 %v390
    %421 = vmatprep.subr.mxu0 0.0
    %422 = vmatpush1.msra.mxu0 %v391
    %423 = vmatprep.subr.mxu0 0.0
    %424 = vmatpush1.msra.mxu0 %v392
    %425 = vmatprep.subr.mxu0 0.0
    %426 = vmatpush1.msra.mxu0 0.0
    %427 = vmatprep.subr.mxu0 0.0
    %428 = vmatpush1.msra.mxu0 0.0
    %429 = vmatprep.subr.mxu0 0.0
    %430 = vmatpush1.msra.mxu0 0.0
    %431 = vmatprep.subr.mxu0 0.0
    %432 = vmatpush1.msra.mxu0 0.0
    %433 = vmatprep.subr.mxu0 0.0
    %434 = vmatpush1.msra.mxu0 0.0
    %435 = vmatprep.subr.mxu0 0.0
    %436 = vmatpush1.msra.mxu0 0.0
    %437 = vmatprep.subr.mxu0 0.0
    %438 = vmatpush1.msra.mxu0 0.0
    %439 = vmatprep.subr.mxu0 0.0
    %440 = vmatpush1.msra.mxu0 0.0
    %441 = vmatprep.subr.mxu0 0.0
    %442 = vmatpush1.msra.mxu0 0.0
    %443 = vmatprep.subr.mxu0 0.0
    %444 = vmatpush1.msra.mxu0 0.0
    %445 = vmatprep.subr.mxu0 0.0
    %446 = vmatpush1.msra.mxu0 0.0
    %447 = vmatprep.subr.mxu0 0.0
    %448 = vmatpush1.msra.mxu0 0.0
    %449 = vmatprep.subr.mxu0 0.0
    %450 = vmatpush1.msra.mxu0 0.0
    %451 = vmatprep.subr.mxu0 0.0
    %452 = vmatpush1.msra.mxu0 0.0
    %453 = vmatprep.subr.mxu0 0.0
    %454 = vmatpush1.msra.mxu0 0.0
    %455 = vmatprep.subr.mxu0 0.0
    %456 = vmatpush1.msra.mxu0 0.0
    %457 = vmatprep.mubr.f32.mxu0 0.0
    %458 = vmatmul.mubr.f32.gmra.mrb[0].mxu0 %v361
    %v459 = vpop.f32.mrb[0].mxu0
    %v460 = vadd.f32 0.0, %v459
    %v461 = vpop.f32.mrb[0].mxu0
    %462 = vmatprep.mubr.f32.mxu0 0.0
    %463 = vmatmul.mubr.f32.gmra.mrb[0].mxu0 %v362
    %v464 = vpop.f32.mrb[0].mxu0
    %v465 = vadd.f32 0.0, %v464
    %v466 = vpop.f32.mrb[0].mxu0
    %467 = vmatprep.mubr.f32.mxu0 0.0
    %468 = vmatmul.mubr.f32.gmra.mrb[0].mxu0 %v363
    %v469 = vpop.f32.mrb[0].mxu0
    %v470 = vadd.f32 0.0, %v469
    %v471 = vpop.f32.mrb[0].mxu0
    %472 = vmatprep.mubr.f32.mxu0 0.0
    %473 = vmatmul.mubr.f32.gmra.mrb[0].mxu0 %v364
    %v474 = vpop.f32.mrb[0].mxu0
    %v475 = vadd.f32 0.0, %v474
    %v476 = vpop.f32.mrb[0].mxu0
    %477 = vmatprep.mubr.f32.mxu0 0.0
    %478 = vmatmul.mubr.f32.gmra.mrb[0].mxu0 %v365
    %v479 = vpop.f32.mrb[0].mxu0
    %v480 = vadd.f32 0.0, %v479
    %v481 = vpop.f32.mrb[0].mxu0
    %482 = vmatprep.mubr.f32.mxu0 0.0
    %483 = vmatmul.mubr.f32.gmra.mrb[0].mxu0 %v366
    %v484 = vpop.f32.mrb[0].mxu0
    %v485 = vadd.f32 0.0, %v484
    %v486 = vpop.f32.mrb[0].mxu0
    %487 = vmatprep.mubr.f32.mxu0 0.0
    %488 = vmatmul.mubr.f32.gmra.mrb[0].mxu0 %v367
    %v489 = vpop.f32.mrb[0].mxu0
    %v490 = vadd.f32 0.0, %v489
    %v491 = vpop.f32.mrb[0].mxu0
    %492 = vmatprep.mubr.f32.mxu0 0.0
    %493 = vmatmul.mubr.f32.gmra.mrb[0].mxu0 %v368
    %v494 = vpop.f32.mrb[0].mxu0
    %v495 = vadd.f32 0.0, %v494
    %v496 = vpop.f32.mrb[0].mxu0
    %497 = vmatprep.mubr.f32.mxu0 0.0
    %498 = vmatmul.mubr.f32.gmra.mrb[0].mxu0 %v369
    %v499 = vpop.f32.mrb[0].mxu0
    %v500 = vadd.f32 0.0, %v499
    %v501 = vpop.f32.mrb[0].mxu0
    %502 = vmatprep.mubr.f32.mxu0 0.0
    %503 = vmatmul.mubr.f32.gmra.mrb[0].mxu0 %v370
    %v504 = vpop.f32.mrb[0].mxu0
    %v505 = vadd.f32 0.0, %v504
    %v506 = vpop.f32.mrb[0].mxu0
    %507 = vmatprep.mubr.f32.mxu0 0.0
    %508 = vmatmul.mubr.f32.gmra.mrb[0].mxu0 %v371
    %v509 = vpop.f32.mrb[0].mxu0
    %v510 = vadd.f32 0.0, %v509
    %v511 = vpop.f32.mrb[0].mxu0
    %512 = vmatprep.mubr.f32.mxu0 0.0
    %513 = vmatmul.mubr.f32.gmra.mrb[0].mxu0 %v372
    %v514 = vpop.f32.mrb[0].mxu0
    %v515 = vadd.f32 0.0, %v514
    %v516 = vpop.f32.mrb[0].mxu0
    %517 = vmatprep.mubr.f32.mxu0 0.0
    %518 = vmatmul.mubr.f32.gmra.mrb[0].mxu0 %v373
    %v519 = vpop.f32.mrb[0].mxu0
    %v520 = vadd.f32 0.0, %v519
    %v521 = vpop.f32.mrb[0].mxu0
    %522 = vmatprep.mubr.f32.mxu0 0.0
    %523 = vmatmul.mubr.f32.gmra.mrb[0].mxu0 %v374
    %v524 = vpop.f32.mrb[0].mxu0
    %v525 = vadd.f32 0.0, %v524
    %v526 = vpop.f32.mrb[0].mxu0
    %527 = vmatprep.mubr.f32.mxu0 0.0
    %528 = vmatmul.mubr.f32.gmra.mrb[0].mxu0 %v375
    %v529 = vpop.f32.mrb[0].mxu0
    %v530 = vadd.f32 0.0, %v529
    %v531 = vpop.f32.mrb[0].mxu0
    %532 = vmatprep.mubr.f32.mxu0 0.0
    %533 = vmatmul.mubr.f32.gmra.mrb[0].mxu0 %v376
    %v534 = vpop.f32.mrb[0].mxu0
    %v535 = vadd.f32 0.0, %v534
    %v536 = vpop.f32.mrb[0].mxu0
    %537 = vdwg.mxu0
    %538 = vst [vmem:[#allocation2] sm:$0xff] %v460
    %539 = vst [vmem:[#allocation2 + $0x8] sm:$0xff] %v465
    %540 = vst [vmem:[#allocation2 + $0x10] sm:$0xff] %v470
    %541 = vst [vmem:[#allocation2 + $0x18] sm:$0xff] %v475
    %542 = vst [vmem:[#allocation2 + $0x20] sm:$0xff] %v480
    %543 = vst [vmem:[#allocation2 + $0x28] sm:$0xff] %v485
    %544 = vst [vmem:[#allocation2 + $0x30] sm:$0xff] %v490
    %545 = vst [vmem:[#allocation2 + $0x38] sm:$0xff] %v495
    %546 = vst [vmem:[#allocation2 + $0x40] sm:$0xff] %v500
    %547 = vst [vmem:[#allocation2 + $0x48] sm:$0xff] %v505
    %548 = vst [vmem:[#allocation2 + $0x50] sm:$0xff] %v510
    %549 = vst [vmem:[#allocation2 + $0x58] sm:$0xff] %v515
    %550 = vst [vmem:[#allocation2 + $0x60] sm:$0xff] %v520
    %551 = vst [vmem:[#allocation2 + $0x68] sm:$0xff] %v525
    %552 = vst [vmem:[#allocation2 + $0x70] sm:$0xff] %v530
    %553 = vst [vmem:[#allocation2 + $0x78] sm:$0xff] %v535
    %v554 = vld [vmem:[#allocation8] sm:$0xff]
    %v555 = vld [vmem:[#allocation8 + $0x8] sm:$0xff]
    %v556 = vld [vmem:[#allocation8 + $0x10] sm:$0xff]
    %v557 = vld [vmem:[#allocation8 + $0x18] sm:$0xff]
    %v558 = vld [vmem:[#allocation8 + $0x20] sm:$0xff]
    %v559 = vld [vmem:[#allocation8 + $0x28] sm:$0xff]
    %v560 = vld [vmem:[#allocation8 + $0x30] sm:$0xff]
    %v561 = vld [vmem:[#allocation8 + $0x38] sm:$0xff]
    %v562 = vld [vmem:[#allocation8 + $0x40] sm:$0xff]
    %v563 = vld [vmem:[#allocation8 + $0x48] sm:$0xff]
    %v564 = vld [vmem:[#allocation8 + $0x50] sm:$0xff]
    %v565 = vld [vmem:[#allocation8 + $0x58] sm:$0xff]
    %v566 = vld [vmem:[#allocation8 + $0x60] sm:$0xff]
    %v567 = vld [vmem:[#allocation8 + $0x68] sm:$0xff]
    %v568 = vld [vmem:[#allocation8 + $0x70] sm:$0xff]
    %v569 = vld [vmem:[#allocation8 + $0x78] sm:$0xff]
    %v570 = vld [vmem:[#allocation2] sm:$0xff]
    %v571 = vld [vmem:[#allocation2 + $0x8] sm:$0xff]
    %v572 = vld [vmem:[#allocation2 + $0x10] sm:$0xff]
    %v573 = vld [vmem:[#allocation2 + $0x18] sm:$0xff]
    %v574 = vld [vmem:[#allocation2 + $0x20] sm:$0xff]
    %v575 = vld [vmem:[#allocation2 + $0x28] sm:$0xff]
    %v576 = vld [vmem:[#allocation2 + $0x30] sm:$0xff]
    %v577 = vld [vmem:[#allocation2 + $0x38] sm:$0xff]
    %v578 = vld [vmem:[#allocation2 + $0x40] sm:$0xff]
    %v579 = vld [vmem:[#allocation2 + $0x48] sm:$0xff]
    %v580 = vld [vmem:[#allocation2 + $0x50] sm:$0xff]
    %v581 = vld [vmem:[#allocation2 + $0x58] sm:$0xff]
    %v582 = vld [vmem:[#allocation2 + $0x60] sm:$0xff]
    %v583 = vld [vmem:[#allocation2 + $0x68] sm:$0xff]
    %v584 = vld [vmem:[#allocation2 + $0x70] sm:$0xff]
    %v585 = vld [vmem:[#allocation2 + $0x78] sm:$0xff]
    %v586 = vadd.f32 %v554, %v570
    %v587 = vadd.f32 %v555, %v571
    %v588 = vadd.f32 %v556, %v572
    %v589 = vadd.f32 %v557, %v573
    %v590 = vadd.f32 %v558, %v574
    %v591 = vadd.f32 %v559, %v575
    %v592 = vadd.f32 %v560, %v576
    %v593 = vadd.f32 %v561, %v577
    %v594 = vadd.f32 %v562, %v578
    %v595 = vadd.f32 %v563, %v579
    %v596 = vadd.f32 %v564, %v580
    %v597 = vadd.f32 %v565, %v581
    %v598 = vadd.f32 %v566, %v582
    %v599 = vadd.f32 %v567, %v583
    %v600 = vadd.f32 %v568, %v584
    %v601 = vadd.f32 %v569, %v585
    %602 = vst [vmem:[#allocation8] sm:$0xff] %v586
    %603 = vst [vmem:[#allocation8 + $0x8] sm:$0xff] %v587
    %604 = vst [vmem:[#allocation8 + $0x10] sm:$0xff] %v588
    %605 = vst [vmem:[#allocation8 + $0x18] sm:$0xff] %v589
    %606 = vst [vmem:[#allocation8 + $0x20] sm:$0xff] %v590
    %607 = vst [vmem:[#allocation8 + $0x28] sm:$0xff] %v591
    %608 = vst [vmem:[#allocation8 + $0x30] sm:$0xff] %v592
    %609 = vst [vmem:[#allocation8 + $0x38] sm:$0xff] %v593
    %610 = vst [vmem:[#allocation8 + $0x40] sm:$0xff] %v594
    %611 = vst [vmem:[#allocation8 + $0x48] sm:$0xff] %v595
    %612 = vst [vmem:[#allocation8 + $0x50] sm:$0xff] %v596
    %613 = vst [vmem:[#allocation8 + $0x58] sm:$0xff] %v597
    %614 = vst [vmem:[#allocation8 + $0x60] sm:$0xff] %v598
    %615 = vst [vmem:[#allocation8 + $0x68] sm:$0xff] %v599
    %616 = vst [vmem:[#allocation8 + $0x70] sm:$0xff] %v600
    %617 = vst [vmem:[#allocation8 + $0x78] sm:$0xff] %v601
    %v618 = vld [vmem:[#allocation3] sm:$0xff]
    %v619 = vld [vmem:[#allocation3 + $0x8] sm:$0xff]
    %v620 = vld [vmem:[#allocation3 + $0x10] sm:$0xff]
    %v621 = vld [vmem:[#allocation3 + $0x18] sm:$0xff]
    %v622 = vld [vmem:[#allocation3 + $0x20] sm:$0xff]
    %v623 = vld [vmem:[#allocation3 + $0x28] sm:$0xff]
    %v624 = vld [vmem:[#allocation3 + $0x30] sm:$0xff]
    %v625 = vld [vmem:[#allocation3 + $0x38] sm:$0xff]
    %v626 = vld [vmem:[#allocation3 + $0x40] sm:$0xff]
    %v627 = vld [vmem:[#allocation3 + $0x48] sm:$0xff]
    %v628 = vld [vmem:[#allocation3 + $0x50] sm:$0xff]
    %v629 = vld [vmem:[#allocation3 + $0x58] sm:$0xff]
    %v630 = vld [vmem:[#allocation3 + $0x60] sm:$0xff]
    %v631 = vld [vmem:[#allocation3 + $0x68] sm:$0xff]
    %v632 = vld [vmem:[#allocation3 + $0x70] sm:$0xff]
    %v633 = vld [vmem:[#allocation3 + $0x78] sm:$0xff]
    %v634 = vld [vmem:[#allocation2] sm:$0xff]
    %v635 = vld [vmem:[#allocation2 + $0x8] sm:$0xff]
    %v636 = vld [vmem:[#allocation2 + $0x10] sm:$0xff]
    %v637 = vld [vmem:[#allocation2 + $0x18] sm:$0xff]
    %v638 = vld [vmem:[#allocation2 + $0x20] sm:$0xff]
    %v639 = vld [vmem:[#allocation2 + $0x28] sm:$0xff]
    %v640 = vld [vmem:[#allocation2 + $0x30] sm:$0xff]
    %v641 = vld [vmem:[#allocation2 + $0x38] sm:$0xff]
    %v642 = vld [vmem:[#allocation2 + $0x40] sm:$0xff]
    %v643 = vld [vmem:[#allocation2 + $0x48] sm:$0xff]
    %v644 = vld [vmem:[#allocation2 + $0x50] sm:$0xff]
    %v645 = vld [vmem:[#allocation2 + $0x58] sm:$0xff]
    %v646 = vld [vmem:[#allocation2 + $0x60] sm:$0xff]
    %v647 = vld [vmem:[#allocation2 + $0x68] sm:$0xff]
    %v648 = vld [vmem:[#allocation2 + $0x70] sm:$0xff]
    %v649 = vld [vmem:[#allocation2 + $0x78] sm:$0xff]
    %650 = vmatprep.subr.mxu0 0.0
    %651 = vmatpush1.msra.mxu0 %v634
    %652 = vmatprep.subr.mxu0 0.0
    %653 = vmatpush1.msra.mxu0 %v635
    %654 = vmatprep.subr.mxu0 0.0
    %655 = vmatpush1.msra.mxu0 %v636
    %656 = vmatprep.subr.mxu0 0.0
    %657 = vmatpush1.msra.mxu0 %v637
    %658 = vmatprep.subr.mxu0 0.0
    %659 = vmatpush1.msra.mxu0 %v638
    %660 = vmatprep.subr.mxu0 0.0
    %661 = vmatpush1.msra.mxu0 %v639
    %662 = vmatprep.subr.mxu0 0.0
    %663 = vmatpush1.msra.mxu0 %v640
    %664 = vmatprep.subr.mxu0 0.0
    %665 = vmatpush1.msra.mxu0 %v641
    %666 = vmatprep.subr.mxu0 0.0
    %667 = vmatpush1.msra.mxu0 %v642
    %668 = vmatprep.subr.mxu0 0.0
    %669 = vmatpush1.msra.mxu0 %v643
    %670 = vmatprep.subr.mxu0 0.0
    %671 = vmatpush1.msra.mxu0 %v644
    %672 = vmatprep.subr.mxu0 0.0
    %673 = vmatpush1.msra.mxu0 %v645
    %674 = vmatprep.subr.mxu0 0.0
    %675 = vmatpush1.msra.mxu0 %v646
    %676 = vmatprep.subr.mxu0 0.0
    %677 = vmatpush1.msra.mxu0 %v647
    %678 = vmatprep.subr.mxu0 0.0
    %679 = vmatpush1.msra.mxu0 %v648
    %680 = vmatprep.subr.mxu0 0.0
    %681 = vmatpush1.msra.mxu0 %v649
    %682 = vmatprep.subr.mxu0 0.0
    %683 = vmatpush1.msra.mxu0 0.0
    %684 = vmatprep.subr.mxu0 0.0
    %685 = vmatpush1.msra.mxu0 0.0
    %686 = vmatprep.subr.mxu0 0.0
    %687 = vmatpush1.msra.mxu0 0.0
    %688 = vmatprep.subr.mxu0 0.0
    %689 = vmatpush1.msra.mxu0 0.0
    %690 = vmatprep.subr.mxu0 0.0
    %691 = vmatpush1.msra.mxu0 0.0
    %692 = vmatprep.subr.mxu0 0.0
    %693 = vmatpush1.msra.mxu0 0.0
    %694 = vmatprep.subr.mxu0 0.0
    %695 = vmatpush1.msra.mxu0 0.0
    %696 = vmatprep.subr.mxu0 0.0
    %697 = vmatpush1.msra.mxu0 0.0
    %698 = vmatprep.subr.mxu0 0.0
    %699 = vmatpush1.msra.mxu0 0.0
    %700 = vmatprep.subr.mxu0 0.0
    %701 = vmatpush1.msra.mxu0 0.0
    %702 = vmatprep.subr.mxu0 0.0
    %703 = vmatpush1.msra.mxu0 0.0
    %704 = vmatprep.subr.mxu0 0.0
    %705 = vmatpush1.msra.mxu0 0.0
    %706 = vmatprep.subr.mxu0 0.0
    %707 = vmatpush1.msra.mxu0 0.0
    %708 = vmatprep.subr.mxu0 0.0
    %709 = vmatpush1.msra.mxu0 0.0
    %710 = vmatprep.subr.mxu0 0.0
    %711 = vmatpush1.msra.mxu0 0.0
    %712 = vmatprep.subr.mxu0 0.0
    %713 = vmatpush1.msra.mxu0 0.0
    %714 = vmatprep.mubr.f32.mxu0 0.0
    %715 = vmatmul.mubr.f32.gmra.mrb[0].mxu0 %v618
    %v716 = vpop.f32.mrb[0].mxu0
    %v717 = vadd.f32 0.0, %v716
    %v718 = vpop.f32.mrb[0].mxu0
    %719 = vmatprep.mubr.f32.mxu0 0.0
    %720 = vmatmul.mubr.f32.gmra.mrb[0].mxu0 %v619
    %v721 = vpop.f32.mrb[0].mxu0
    %v722 = vadd.f32 0.0, %v721
    %v723 = vpop.f32.mrb[0].mxu0
    %724 = vmatprep.mubr.f32.mxu0 0.0
    %725 = vmatmul.mubr.f32.gmra.mrb[0].mxu0 %v620
    %v726 = vpop.f32.mrb[0].mxu0
    %v727 = vadd.f32 0.0, %v726
    %v728 = vpop.f32.mrb[0].mxu0
    %729 = vmatprep.mubr.f32.mxu0 0.0
    %730 = vmatmul.mubr.f32.gmra.mrb[0].mxu0 %v621
    %v731 = vpop.f32.mrb[0].mxu0
    %v732 = vadd.f32 0.0, %v731
    %v733 = vpop.f32.mrb[0].mxu0
    %734 = vmatprep.mubr.f32.mxu0 0.0
    %735 = vmatmul.mubr.f32.gmra.mrb[0].mxu0 %v622
    %v736 = vpop.f32.mrb[0].mxu0
    %v737 = vadd.f32 0.0, %v736
    %v738 = vpop.f32.mrb[0].mxu0
    %739 = vmatprep.mubr.f32.mxu0 0.0
    %740 = vmatmul.mubr.f32.gmra.mrb[0].mxu0 %v623
    %v741 = vpop.f32.mrb[0].mxu0
    %v742 = vadd.f32 0.0, %v741
    %v743 = vpop.f32.mrb[0].mxu0
    %744 = vmatprep.mubr.f32.mxu0 0.0
    %745 = vmatmul.mubr.f32.gmra.mrb[0].mxu0 %v624
    %v746 = vpop.f32.mrb[0].mxu0
    %v747 = vadd.f32 0.0, %v746
    %v748 = vpop.f32.mrb[0].mxu0
    %749 = vmatprep.mubr.f32.mxu0 0.0
    %750 = vmatmul.mubr.f32.gmra.mrb[0].mxu0 %v625
    %v751 = vpop.f32.mrb[0].mxu0
    %v752 = vadd.f32 0.0, %v751
    %v753 = vpop.f32.mrb[0].mxu0
    %754 = vmatprep.mubr.f32.mxu0 0.0
    %755 = vmatmul.mubr.f32.gmra.mrb[0].mxu0 %v626
    %v756 = vpop.f32.mrb[0].mxu0
    %v757 = vadd.f32 0.0, %v756
    %v758 = vpop.f32.mrb[0].mxu0
    %759 = vmatprep.mubr.f32.mxu0 0.0
    %760 = vmatmul.mubr.f32.gmra.mrb[0].mxu0 %v627
    %v761 = vpop.f32.mrb[0].mxu0
    %v762 = vadd.f32 0.0, %v761
    %v763 = vpop.f32.mrb[0].mxu0
    %764 = vmatprep.mubr.f32.mxu0 0.0
    %765 = vmatmul.mubr.f32.gmra.mrb[0].mxu0 %v628
    %v766 = vpop.f32.mrb[0].mxu0
    %v767 = vadd.f32 0.0, %v766
    %v768 = vpop.f32.mrb[0].mxu0
    %769 = vmatprep.mubr.f32.mxu0 0.0
    %770 = vmatmul.mubr.f32.gmra.mrb[0].mxu0 %v629
    %v771 = vpop.f32.mrb[0].mxu0
    %v772 = vadd.f32 0.0, %v771
    %v773 = vpop.f32.mrb[0].mxu0
    %774 = vmatprep.mubr.f32.mxu0 0.0
    %775 = vmatmul.mubr.f32.gmra.mrb[0].mxu0 %v630
    %v776 = vpop.f32.mrb[0].mxu0
    %v777 = vadd.f32 0.0, %v776
    %v778 = vpop.f32.mrb[0].mxu0
    %779 = vmatprep.mubr.f32.mxu0 0.0
    %780 = vmatmul.mubr.f32.gmra.mrb[0].mxu0 %v631
    %v781 = vpop.f32.mrb[0].mxu0
    %v782 = vadd.f32 0.0, %v781
    %v783 = vpop.f32.mrb[0].mxu0
    %784 = vmatprep.mubr.f32.mxu0 0.0
    %785 = vmatmul.mubr.f32.gmra.mrb[0].mxu0 %v632
    %v786 = vpop.f32.mrb[0].mxu0
    %v787 = vadd.f32 0.0, %v786
    %v788 = vpop.f32.mrb[0].mxu0
    %789 = vmatprep.mubr.f32.mxu0 0.0
    %790 = vmatmul.mubr.f32.gmra.mrb[0].mxu0 %v633
    %v791 = vpop.f32.mrb[0].mxu0
    %v792 = vadd.f32 0.0, %v791
    %v793 = vpop.f32.mrb[0].mxu0
    %794 = vdwg.mxu0
    %795 = vst [vmem:[#allocation2] sm:$0xff] %v717
    %796 = vst [vmem:[#allocation2 + $0x8] sm:$0xff] %v722
    %797 = vst [vmem:[#allocation2 + $0x10] sm:$0xff] %v727
    %798 = vst [vmem:[#allocation2 + $0x18] sm:$0xff] %v732
    %799 = vst [vmem:[#allocation2 + $0x20] sm:$0xff] %v737
    %800 = vst [vmem:[#allocation2 + $0x28] sm:$0xff] %v742
    %801 = vst [vmem:[#allocation2 + $0x30] sm:$0xff] %v747
    %802 = vst [vmem:[#allocation2 + $0x38] sm:$0xff] %v752
    %803 = vst [vmem:[#allocation2 + $0x40] sm:$0xff] %v757
    %804 = vst [vmem:[#allocation2 + $0x48] sm:$0xff] %v762
    %805 = vst [vmem:[#allocation2 + $0x50] sm:$0xff] %v767
    %806 = vst [vmem:[#allocation2 + $0x58] sm:$0xff] %v772
    %807 = vst [vmem:[#allocation2 + $0x60] sm:$0xff] %v777
    %808 = vst [vmem:[#allocation2 + $0x68] sm:$0xff] %v782
    %809 = vst [vmem:[#allocation2 + $0x70] sm:$0xff] %v787
    %810 = vst [vmem:[#allocation2 + $0x78] sm:$0xff] %v792
    %v811 = vld [vmem:[#allocation8] sm:$0xff]
    %v812 = vld [vmem:[#allocation8 + $0x8] sm:$0xff]
    %v813 = vld [vmem:[#allocation8 + $0x10] sm:$0xff]
    %v814 = vld [vmem:[#allocation8 + $0x18] sm:$0xff]
    %v815 = vld [vmem:[#allocation8 + $0x20] sm:$0xff]
    %v816 = vld [vmem:[#allocation8 + $0x28] sm:$0xff]
    %v817 = vld [vmem:[#allocation8 + $0x30] sm:$0xff]
    %v818 = vld [vmem:[#allocation8 + $0x38] sm:$0xff]
    %v819 = vld [vmem:[#allocation8 + $0x40] sm:$0xff]
    %v820 = vld [vmem:[#allocation8 + $0x48] sm:$0xff]
    %v821 = vld [vmem:[#allocation8 + $0x50] sm:$0xff]
    %v822 = vld [vmem:[#allocation8 + $0x58] sm:$0xff]
    %v823 = vld [vmem:[#allocation8 + $0x60] sm:$0xff]
    %v824 = vld [vmem:[#allocation8 + $0x68] sm:$0xff]
    %v825 = vld [vmem:[#allocation8 + $0x70] sm:$0xff]
    %v826 = vld [vmem:[#allocation8 + $0x78] sm:$0xff]
    %v827 = vld [vmem:[#allocation2] sm:$0xff]
    %v828 = vld [vmem:[#allocation2 + $0x8] sm:$0xff]
    %v829 = vld [vmem:[#allocation2 + $0x10] sm:$0xff]
    %v830 = vld [vmem:[#allocation2 + $0x18] sm:$0xff]
    %v831 = vld [vmem:[#allocation2 + $0x20] sm:$0xff]
    %v832 = vld [vmem:[#allocation2 + $0x28] sm:$0xff]
    %v833 = vld [vmem:[#allocation2 + $0x30] sm:$0xff]
    %v834 = vld [vmem:[#allocation2 + $0x38] sm:$0xff]
    %v835 = vld [vmem:[#allocation2 + $0x40] sm:$0xff]
    %v836 = vld [vmem:[#allocation2 + $0x48] sm:$0xff]
    %v837 = vld [vmem:[#allocation2 + $0x50] sm:$0xff]
    %v838 = vld [vmem:[#allocation2 + $0x58] sm:$0xff]
    %v839 = vld [vmem:[#allocation2 + $0x60] sm:$0xff]
    %v840 = vld [vmem:[#allocation2 + $0x68] sm:$0xff]
    %v841 = vld [vmem:[#allocation2 + $0x70] sm:$0xff]
    %v842 = vld [vmem:[#allocation2 + $0x78] sm:$0xff]
    %v843 = vadd.f32 %v811, %v827
    %v844 = vadd.f32 %v812, %v828
    %v845 = vadd.f32 %v813, %v829
    %v846 = vadd.f32 %v814, %v830
    %v847 = vadd.f32 %v815, %v831
    %v848 = vadd.f32 %v816, %v832
    %v849 = vadd.f32 %v817, %v833
    %v850 = vadd.f32 %v818, %v834
    %v851 = vadd.f32 %v819, %v835
    %v852 = vadd.f32 %v820, %v836
    %v853 = vadd.f32 %v821, %v837
    %v854 = vadd.f32 %v822, %v838
    %v855 = vadd.f32 %v823, %v839
    %v856 = vadd.f32 %v824, %v840
    %v857 = vadd.f32 %v825, %v841
    %v858 = vadd.f32 %v826, %v842
    %859 = vst [vmem:[#allocation8] sm:$0xff] %v843
    %860 = vst [vmem:[#allocation8 + $0x8] sm:$0xff] %v844
    %861 = vst [vmem:[#allocation8 + $0x10] sm:$0xff] %v845
    %862 = vst [vmem:[#allocation8 + $0x18] sm:$0xff] %v846
    %863 = vst [vmem:[#allocation8 + $0x20] sm:$0xff] %v847
    %864 = vst [vmem:[#allocation8 + $0x28] sm:$0xff] %v848
    %865 = vst [vmem:[#allocation8 + $0x30] sm:$0xff] %v849
    %866 = vst [vmem:[#allocation8 + $0x38] sm:$0xff] %v850
    %867 = vst [vmem:[#allocation8 + $0x40] sm:$0xff] %v851
    %868 = vst [vmem:[#allocation8 + $0x48] sm:$0xff] %v852
    %869 = vst [vmem:[#allocation8 + $0x50] sm:$0xff] %v853
    %870 = vst [vmem:[#allocation8 + $0x58] sm:$0xff] %v854
    %871 = vst [vmem:[#allocation8 + $0x60] sm:$0xff] %v855
    %872 = vst [vmem:[#allocation8 + $0x68] sm:$0xff] %v856
    %873 = vst [vmem:[#allocation8 + $0x70] sm:$0xff] %v857
    %874 = vst [vmem:[#allocation8 + $0x78] sm:$0xff] %v858
    %v875 = vld [vmem:[#allocation8] sm:$0xff]
    %v876 = vld [vmem:[#allocation8 + $0x8] sm:$0xff]
    %v877 = vld [vmem:[#allocation8 + $0x10] sm:$0xff]
    %v878 = vld [vmem:[#allocation8 + $0x18] sm:$0xff]
    %v879 = vld [vmem:[#allocation8 + $0x20] sm:$0xff]
    %v880 = vld [vmem:[#allocation8 + $0x28] sm:$0xff]
    %v881 = vld [vmem:[#allocation8 + $0x30] sm:$0xff]
    %v882 = vld [vmem:[#allocation8 + $0x38] sm:$0xff]
    %v883 = vld [vmem:[#allocation8 + $0x40] sm:$0xff]
    %v884 = vld [vmem:[#allocation8 + $0x48] sm:$0xff]
    %v885 = vld [vmem:[#allocation8 + $0x50] sm:$0xff]
    %v886 = vld [vmem:[#allocation8 + $0x58] sm:$0xff]
    %v887 = vld [vmem:[#allocation8 + $0x60] sm:$0xff]
    %v888 = vld [vmem:[#allocation8 + $0x68] sm:$0xff]
    %v889 = vld [vmem:[#allocation8 + $0x70] sm:$0xff]
    %v890 = vld [vmem:[#allocation8 + $0x78] sm:$0xff]
    %v891 = vmul.f32 %v875, 0.25
    %v892 = vmul.f32 %v876, 0.25
    %v893 = vmul.f32 %v877, 0.25
    %v894 = vmul.f32 %v878, 0.25
    %v895 = vmul.f32 %v879, 0.25
    %v896 = vmul.f32 %v880, 0.25
    %v897 = vmul.f32 %v881, 0.25
    %v898 = vmul.f32 %v882, 0.25
    %v899 = vmul.f32 %v883, 0.25
    %v900 = vmul.f32 %v884, 0.25
    %v901 = vmul.f32 %v885, 0.25
    %v902 = vmul.f32 %v886, 0.25
    %v903 = vmul.f32 %v887, 0.25
    %v904 = vmul.f32 %v888, 0.25
    %v905 = vmul.f32 %v889, 0.25
    %v906 = vmul.f32 %v890, 0.25
    %907 = vst [vmem:[#allocation8] sm:$0xff] %v891
    %908 = vst [vmem:[#allocation8 + $0x8] sm:$0xff] %v892
    %909 = vst [vmem:[#allocation8 + $0x10] sm:$0xff] %v893
    %910 = vst [vmem:[#allocation8 + $0x18] sm:$0xff] %v894
    %911 = vst [vmem:[#allocation8 + $0x20] sm:$0xff] %v895
    %912 = vst [vmem:[#allocation8 + $0x28] sm:$0xff] %v896
    %913 = vst [vmem:[#allocation8 + $0x30] sm:$0xff] %v897
    %914 = vst [vmem:[#allocation8 + $0x38] sm:$0xff] %v898
    %915 = vst [vmem:[#allocation8 + $0x40] sm:$0xff] %v899
    %916 = vst [vmem:[#allocation8 + $0x48] sm:$0xff] %v900
    %917 = vst [vmem:[#allocation8 + $0x50] sm:$0xff] %v901
    %918 = vst [vmem:[#allocation8 + $0x58] sm:$0xff] %v902
    %919 = vst [vmem:[#allocation8 + $0x60] sm:$0xff] %v903
    %920 = vst [vmem:[#allocation8 + $0x68] sm:$0xff] %v904
    %921 = vst [vmem:[#allocation8 + $0x70] sm:$0xff] %v905
    %922 = vst [vmem:[#allocation8 + $0x78] sm:$0xff] %v906
    // Predicated region
    $region18: #{tpu_custom_call.1} parent=1 // pred_check
      _
    $region19: #{tpu_custom_call.1} parent=1 // pred_check_branch
      %924 = sbr.rel (0) target = $region21
    $region20: #{tpu_custom_call.1} parent=1 // pred_region
      %s926 = ssub.s32 2048, 2048
      %927 = vsyncadd [#allocation5], %s926
      %s928 = sshll.u32 [#allocation8], 4
      %s929 = int_to_ptr.vmem [resolvable:$true] %s928
      %934 = dma.vmem_to_hbm [thread:$0]  %s929, 2048, %s2, [#allocation5], 128, 128, 8
    $region21: #{tpu_custom_call.1} parent=1 // pred_fallthru
      _
    // Predicated region
    $region22: #{tpu_custom_call.1} parent=1 // pred_check
      _
    $region23: #{tpu_custom_call.1} parent=1 // pred_check_branch
      %936 = sbr.rel (0) target = $region25
    $region24: #{tpu_custom_call.1} parent=1 // pred_region
      %937 = dma.done [#allocation5], 2048
    $region25: #{tpu_custom_call.1} parent=1 // pred_fallthru
      _
    %938 = vsyncpa [#allocation4], 1
    %939 = vsyncpa [#allocation7], 1
    %940 = vsyncpa [#allocation5], 1

</llo_original>
